<compile_context>
chip_gen: v7x
topology: tpu7x:2x2x1
jax: 0.10.0
libtpu: 0.0.40
codegen_flags: <defaults>
</compile_context>

<pallas_src>
import jax
import jax.numpy as jnp
from jax.experimental import pallas as pl
from jax.experimental.pallas import tpu as pltpu


# ------------------------- fused 1x1 conv + softmax --------------------------
def _depth_kernel(w_ref, b_ref, f_ref, o_ref):
    # w_ref: [D, C_f]   b_ref: [D, 1]   f_ref: [1, C_f, T]   o_ref: [1, D, T]
    f = f_ref[0]                                                   # [C_f, T]
    logits = jnp.dot(w_ref[...], f,
                     preferred_element_type=jnp.float32) + b_ref[...]   # [D, T]
    m = jnp.max(logits, axis=0, keepdims=True)                     # [1, T]  (XLU)
    e = jnp.exp(logits - m)                                        # [D, T]  (EUP)
    denom = jnp.sum(e, axis=0, keepdims=True)                      # [1, T]  (XLU)
    # approx=True -> EUP vrcp (otherwise-idle slot); error ~2^-12 relative.
    o_ref[0] = e * pl.reciprocal(denom, approx=True)


def depth_predictor(features, w, b, *, hw_tile=1024):
    """features: [B, N, C_f, H, W] f32; w: [D, C_f]; b: [D] -> [B, N, D, H, W]."""
    B, N, C_f, H, W = features.shape
    D = w.shape[0]
    HW = H * W

    # Lane-dense spatial tiling: the tile is a multiple of 128 (dense vst) and
    # HW is padded up to a multiple of the tile. Padded columns (features == 0)
    # yield a finite softmax of the bias and are sliced off afterwards.
    tile = min(hw_tile, pl.cdiv(HW, 128) * 128)
    hw_pad = pl.cdiv(HW, tile) * tile

    feat = features.reshape(B * N, C_f, HW)
    if hw_pad != HW:
        feat = jnp.pad(feat, ((0, 0), (0, 0), (0, hw_pad - HW)))

    out = pl.pallas_call(
        _depth_kernel,
        out_shape=jax.ShapeDtypeStruct((B * N, D, hw_pad), jnp.float32),
        grid_spec=pltpu.PrefetchScalarGridSpec(
            num_scalar_prefetch=0,
            grid=(B * N, hw_pad // tile),
            in_specs=[
                pl.BlockSpec((D, C_f), lambda i, j: (0, 0)),       # weights (resident)
                pl.BlockSpec((D, 1), lambda i, j: (0, 0)),         # bias    (resident)
                pl.BlockSpec((1, C_f, tile), lambda i, j: (i, 0, j)),
            ],
            out_specs=pl.BlockSpec((1, D, tile), lambda i, j: (i, 0, j)),
        ),
        compiler_params=pltpu.CompilerParams(
            dimension_semantics=("parallel", "parallel")),
    )(w, b.reshape(D, 1), feat)

    return out[:, :, :HW].reshape(B, N, D, H, W)


# ----------------------------- pure-JAX reference ----------------------------
def depth_predictor_ref(features, w, b):
    B, N, C_f, H, W = features.shape
    feat = features.reshape(B * N, C_f, H * W)
    logits = jnp.einsum("dc,bcp->bdp", w, feat) + b[None, :, None]
    probs = jax.nn.softmax(logits, axis=1)
    return probs.reshape(B, N, w.shape[0], H, W)


if __name__ == "__main__":
    # Small shapes consistent with the module: [B, N, C_f, H_f, W_f].
    B, N, C_f, H, W = 2, 3, 16, 10, 14          # HW = 140 -> padded to 256 in-kernel
    D = 8                                       # num_bins

    key = jax.random.PRNGKey(0)
    k_f, k_w, k_b = jax.random.split(key, 3)
    features = jax.random.normal(k_f, (B, N, C_f, H, W), jnp.float32)
    w_depth = 0.2 * jax.random.normal(k_w, (D, C_f), jnp.float32)   # Conv2d(C_f, D, 1) weight
    b_depth = 0.1 * jax.random.normal(k_b, (D,), jnp.float32)       # Conv2d bias

    out = jax.block_until_ready(depth_predictor(features, w_depth, b_depth))
    assert out.shape == (B, N, D, H, W), out.shape

    ref = depth_predictor_ref(features, w_depth, b_depth)
    # Tolerance accounts for the approx EUP reciprocal in the softmax denominator.
    max_err = float(jnp.max(jnp.abs(out - ref)))
    assert jnp.allclose(out, ref, atol=2e-3, rtol=2e-3), max_err

    print("KERNEL_OK")
</pallas_src>

<mosaic_0001>
module attributes {stable_mosaic.version = 11 : i64} {
  func.func @_depth_kernel(%arg0: i32, %arg1: i32, %arg2: memref<8x16xf32, #tpu.memory_space<vmem>>, %arg3: memref<8x1xf32, #tpu.memory_space<vmem>>, %arg4: memref<1x16x256xf32, #tpu.memory_space<vmem>>, %arg5: memref<1x8x256xf32, #tpu.memory_space<vmem>>) attributes {dimension_semantics = [#tpu.dimension_semantics<parallel>, #tpu.dimension_semantics<parallel>], iteration_bounds = array<i64: 6, 1>, scalar_prefetch = 0 : i64, scratch_operands = 0 : i64, tpu.core_type = #tpu.core_type<tc>, window_params = [{pipeline_mode = #tpu.pipeline_mode<synchronous>, transform_indices = @transform_0, window_bounds = array<i64: 8, 16>}, {pipeline_mode = #tpu.pipeline_mode<synchronous>, transform_indices = @transform_1, window_bounds = array<i64: 8, 1>}, {transform_indices = @transform_2, window_bounds = array<i64: 1, 16, 256>}, {transform_indices = @transform_3, window_bounds = array<i64: 1, 8, 256>}]} {
    %c0 = arith.constant 0 : index
    %c0_0 = arith.constant 0 : index
    %c0_1 = arith.constant 0 : index
    %0 = vector.load %arg4[%c0, %c0_0, %c0_1] : memref<1x16x256xf32, #tpu.memory_space<vmem>>, vector<1x16x256xf32>
    %1 = vector.shape_cast %0 : vector<1x16x256xf32> to vector<16x256xf32>
    %c0_2 = arith.constant 0 : index
    %c0_3 = arith.constant 0 : index
    %2 = vector.load %arg2[%c0_2, %c0_3] : memref<8x16xf32, #tpu.memory_space<vmem>>, vector<8x16xf32>
    %cst = arith.constant dense<0.000000e+00> : vector<8x256xf32>
    %3 = tpu.matmul %2, %1, %cst {dimension_numbers = #tpu.dot_dimension_numbers<[1], [0], [0], [1], [0, 0, 1, 1], [], []>} : vector<8x16xf32>, vector<16x256xf32>, vector<8x256xf32> -> vector<8x256xf32>
    %c0_4 = arith.constant 0 : index
    %c0_5 = arith.constant 0 : index
    %4 = vector.load %arg3[%c0_4, %c0_5] : memref<8x1xf32, #tpu.memory_space<vmem>>, vector<8x1xf32>
    %5 = vector.broadcast %4 : vector<8x1xf32> to vector<8x256xf32>
    %6 = arith.addf %3, %5 : vector<8x256xf32>
    %cst_6 = arith.constant dense<0xFF800000> : vector<256xf32>
    %7 = vector.multi_reduction <maximumf>, %6, %cst_6 [0] : vector<8x256xf32> to vector<256xf32>
    %8 = vector.shape_cast %7 : vector<256xf32> to vector<1x256xf32>
    %9 = vector.broadcast %8 : vector<1x256xf32> to vector<8x256xf32>
    %10 = arith.subf %6, %9 : vector<8x256xf32>
    %11 = math.exp %10 : vector<8x256xf32>
    %cst_7 = arith.constant dense<0.000000e+00> : vector<256xf32>
    %12 = vector.multi_reduction <add>, %11, %cst_7 [0] : vector<8x256xf32> to vector<256xf32>
    %13 = vector.shape_cast %12 : vector<256xf32> to vector<1x256xf32>
    %14 = tpu.reciprocal %13 {approx = true} : vector<1x256xf32> -> vector<1x256xf32>
    %15 = vector.broadcast %14 : vector<1x256xf32> to vector<8x256xf32>
    %16 = arith.mulf %11, %15 : vector<8x256xf32>
    %c0_8 = arith.constant 0 : index
    %c0_9 = arith.constant 0 : index
    %c0_10 = arith.constant 0 : index
    %17 = vector.load %arg5[%c0_8, %c0_9, %c0_10] : memref<1x8x256xf32, #tpu.memory_space<vmem>>, vector<1x8x256xf32>
    %18 = vector.shape_cast %17 : vector<1x8x256xf32> to vector<8x256xf32>
    %19 = vector.shape_cast %16 : vector<8x256xf32> to vector<1x8x256xf32>
    tpu.vector_store %arg5[%c0_8, %c0_9, %c0_10], %19 {strides = array<i32>} : memref<1x8x256xf32, #tpu.memory_space<vmem>>, vector<1x8x256xf32>,
    return
  }
  func.func @transform_0(%arg0: i32, %arg1: i32) -> (i32, i32) {
    %c0_i32 = arith.constant 0 : i32
    %c0_i32_0 = arith.constant 0 : i32
    %c0_i32_1 = arith.constant 0 : i32
    return %c0_i32, %c0_i32_0 : i32, i32
  }
  func.func @transform_1(%arg0: i32, %arg1: i32) -> (i32, i32) {
    %c0_i32 = arith.constant 0 : i32
    %c0_i32_0 = arith.constant 0 : i32
    %c0_i32_1 = arith.constant 0 : i32
    return %c0_i32, %c0_i32_0 : i32, i32
  }
  func.func @transform_2(%arg0: i32, %arg1: i32) -> (i32, i32, i32) {
    %c0_i32 = arith.constant 0 : i32
    %c0_i32_0 = arith.constant 0 : i32
    return %arg0, %c0_i32, %arg1 : i32, i32, i32
  }
  func.func @transform_3(%arg0: i32, %arg1: i32) -> (i32, i32, i32) {
    %c0_i32 = arith.constant 0 : i32
    %c0_i32_0 = arith.constant 0 : i32
    return %arg0, %c0_i32, %arg1 : i32, i32, i32
  }
}

</mosaic_0001>

<llo_original>
// kernel: tpu_custom_call.1
$region0: #{tpu_custom_call.1}
  #allocation0 [shape = 'u32[]', space=smem, size = 0x4, offset = 0x4, fixed_abs, tag = 'smem constant byte address 0x4 - core index']
  #allocation1 [shape = 'u32[144,128]{1,0:T(1,128)}', space=vmem, size = 0x12000, scoped, tag = 'internal scratch']
  %s0 = inlined_call_operand.vmem [shape: f32[8,16], index: 0, kind: input, shape index: {}]
  %s1 = inlined_call_operand.vmem [shape: f32[8,1], index: 1, kind: input, shape index: {}]
  %s2 = inlined_call_operand.hbm [shape: f32[6,16,256], index: 2, kind: input, shape index: {}]
  %s3 = inlined_call_operand.hbm [shape: f32[6,8,256], index: 3, kind: output, shape index: {}]
  %s4 = sld [smem:[#allocation0]]
  $region49: #{tpu_custom_call.1} parent=0
    _
  %s6 = ssub.s32 1, %s4
  %s7 = scalar_select 0, %s6, %s4
  $region1: #{tpu_custom_call.1} parent=0
    #allocation2 [shape = 'u8[32768]{0}', space=vmem, size = 0x8000, scoped, tag = 'input window, operand 2']
    #allocation3 [shape = 's32[2]{0}', space=sflag, size = 0x8, scoped, tag = 'scoped memory for tpu_custom_call.1']
    #allocation4 [shape = 's32[2]{0}', space=sflag, size = 0x8, scoped, tag = 'scoped memory for tpu_custom_call.1']
    #allocation5 [shape = 'u8[16384]{0}', space=vmem, size = 0x4000, scoped, tag = 'output window, operand 0']
    %8 = vsyncpa [#allocation3], 0
    %s9 = scalar_lea.sflag [#allocation3], 1
    %10 = vsyncpa %s9, 0
    %11 = vsyncpa [#allocation4], 0
    %s12 = scalar_lea.sflag [#allocation4], 1
    %13 = vsyncpa %s12, 0
    loop: start=0, step=1, limit=8
    $region2: #{tpu_custom_call.1} parent=1 // loop_pre_header
      _
    $region3: #{tpu_custom_call.1} parent=1 // loop_header
      %s15 = sphi 0, %s19
      %p16 = scmp.ge.s32.totalorder %s15, 8
      %s22 = sphi 0, %s34
      %s23 = sphi 0, %s30
      %s24 = sphi 0, %s22
      %s25 = sphi 0, %s23
      %s26 = sphi 0, %s24
      %s27 = sphi 0, %s25
      %s35 = sphi 0, %s35
      %s37 = sphi 0, %s35
      %s38 = sphi 0, %s37
      %s52 = sphi 0, %s38
      %s56 = sphi 0, %s56
      %s58 = sphi 0, %s56
      %s59 = sphi 0, %s58
      %s73 = sphi 0, %s59
      %s81 = sphi 0, %s83
      %s84 = sphi 0, %s81
      %s85 = sphi 0, %s84
      %s101 = sphi 0, %s85
      %s109 = sphi 0, %s111
      %s112 = sphi 0, %s109
      %s113 = sphi 0, %s112
      %s129 = sphi 0, %s113
    $region4: #{tpu_custom_call.1} parent=1 // loop_header_branch
      %18 = sbr.rel (%p16) target = $region8
    $region5: #{tpu_custom_call.1} parent=1 // loop_body
      %s20 = ssub.s32 %s15, 1
      %s21 = ssub.s32 %s15, 2
      %s28 = sadd.s32 1, %s23
      %p29 = scmp.ge.s32.totalorder %s28, 1
      %s30 = scalar_select %p29, 0, %s28
      %s31 = sadd.s32 1, %s22
      %s32 = scalar_select %p29, %s31, %s22
      %p33 = scmp.ge.s32.totalorder %s32, 6
      %s34 = scalar_select %p33, 0, %s32
      %s36 = sadd.s32 %s35, 1
      %p39 = scmp.eq.s32.totalorder %s15, 5
      %p40 = scmp.ne.s32.totalorder %s35, %s37
      %p41 = scmp.eq.s32.totalorder %s15, 0
      %p42 = por %p40, %p41
      %p43 = scmp.ne.s32.totalorder %s35, %s37
      %p44 = scmp.eq.s32.totalorder %s20, 5
      %p45 = por %p43, %p44
      %p46 = scmp.ne.s32.totalorder %s37, %s38
      %p47 = scmp.eq.s32.totalorder %s20, 0
      %p48 = por %p46, %p47
      %p49 = scmp.ne.s32.totalorder %s37, %s38
      %p50 = scmp.eq.s32.totalorder %s21, 5
      %p51 = por %p49, %p50
      %p53 = scmp.ne.s32.totalorder %s38, %s52
      %p54 = scmp.eq.s32.totalorder %s21, 0
      %p55 = por %p53, %p54
      %s57 = sadd.s32 %s56, 1
      %p60 = scmp.eq.s32.totalorder %s15, 5
      %p61 = scmp.ne.s32.totalorder %s56, %s58
      %p62 = scmp.eq.s32.totalorder %s15, 0
      %p63 = por %p61, %p62
      %p64 = scmp.ne.s32.totalorder %s56, %s58
      %p65 = scmp.eq.s32.totalorder %s20, 5
      %p66 = por %p64, %p65
      %p67 = scmp.ne.s32.totalorder %s58, %s59
      %p68 = scmp.eq.s32.totalorder %s20, 0
      %p69 = por %p67, %p68
      %p70 = scmp.ne.s32.totalorder %s58, %s59
      %p71 = scmp.eq.s32.totalorder %s21, 5
      %p72 = por %p70, %p71
      %p74 = scmp.ne.s32.totalorder %s59, %s73
      %p75 = scmp.eq.s32.totalorder %s21, 0
      %p76 = por %p74, %p75
      %s77 = ssub.s32 %s22, %s34
      %s78 = ssub.s32 %s23, %s30
      %s79 = sor.u32 %s77, %s78
      %p80 = scmp.eq.s32.totalorder %s79, 0
      %s82 = sadd.s32 %s81, 1
      %s83 = scalar_select %p80, %s81, %s82
      %p86 = pneg %p80
      %p87 = scmp.eq.s32.totalorder %s15, 5
      %p88 = por %p86, %p87
      %p89 = scmp.ne.s32.totalorder %s81, %s84
      %p90 = scmp.eq.s32.totalorder %s15, 0
      %p91 = por %p89, %p90
      %p92 = scmp.ne.s32.totalorder %s81, %s84
      %p93 = scmp.eq.s32.totalorder %s20, 5
      %p94 = por %p92, %p93
      %p95 = scmp.ne.s32.totalorder %s84, %s85
      %p96 = scmp.eq.s32.totalorder %s20, 0
      %p97 = por %p95, %p96
      %p98 = scmp.ne.s32.totalorder %s84, %s85
      %p99 = scmp.eq.s32.totalorder %s21, 5
      %p100 = por %p98, %p99
      %p102 = scmp.ne.s32.totalorder %s85, %s101
      %p103 = scmp.eq.s32.totalorder %s21, 0
      %p104 = por %p102, %p103
      %s105 = ssub.s32 %s22, %s34
      %s106 = ssub.s32 %s23, %s30
      %s107 = sor.u32 %s105, %s106
      %p108 = scmp.eq.s32.totalorder %s107, 0
      %s110 = sadd.s32 %s109, 1
      %s111 = scalar_select %p108, %s109, %s110
      %p114 = pneg %p108
      %p115 = scmp.eq.s32.totalorder %s15, 5
      %p116 = por %p114, %p115
      %p117 = scmp.ne.s32.totalorder %s109, %s112
      %p118 = scmp.eq.s32.totalorder %s15, 0
      %p119 = por %p117, %p118
      %p120 = scmp.ne.s32.totalorder %s109, %s112
      %p121 = scmp.eq.s32.totalorder %s20, 5
      %p122 = por %p120, %p121
      %p123 = scmp.ne.s32.totalorder %s112, %s113
      %p124 = scmp.eq.s32.totalorder %s20, 0
      %p125 = por %p123, %p124
      %p126 = scmp.ne.s32.totalorder %s112, %s113
      %p127 = scmp.eq.s32.totalorder %s21, 5
      %p128 = por %p126, %p127
      %p130 = scmp.ne.s32.totalorder %s113, %s129
      %p131 = scmp.eq.s32.totalorder %s21, 0
      %p132 = por %p130, %p131
      %p133 = scmp.le.s32.totalorder 1, %s15
      %p134 = scmp.lt.s32.totalorder %s15, 7
      %p135 = pnand %p133, %p134
      %p136 = pneg %p135
      // Predicated region
      $region9: #{tpu_custom_call.1} parent=5 // pred_check
        _
      $region10: #{tpu_custom_call.1} parent=5 // pred_check_branch
        %138 = sbr.rel (%p135) target = $region12
      $region11: #{tpu_custom_call.1} parent=5 // pred_region
        %s139 = ssub.s32 %s15, 1
        // Predicated region
        $region13: #{tpu_custom_call.1} parent=11 // pred_check
          %p140 = pneg %p48
        $region14: #{tpu_custom_call.1} parent=11 // pred_check_branch
          %142 = sbr.rel (%p140) target = $region16
        $region15: #{tpu_custom_call.1} parent=11 // pred_region
          _
        $region16: #{tpu_custom_call.1} parent=11 // pred_fallthru
          _
        // Predicated region
        $region17: #{tpu_custom_call.1} parent=11 // pred_check
          %p143 = pneg %p69
        $region18: #{tpu_custom_call.1} parent=11 // pred_check_branch
          %145 = sbr.rel (%p143) target = $region20
        $region19: #{tpu_custom_call.1} parent=11 // pred_region
          _
        $region20: #{tpu_custom_call.1} parent=11 // pred_fallthru
          _
      $region12: #{tpu_custom_call.1} parent=5 // pred_fallthru
        _
      %p146 = scmp.lt.s32.totalorder %s15, 6
      // Predicated region
      $region21: #{tpu_custom_call.1} parent=5 // pred_check
        %p147 = pneg %p146
      $region22: #{tpu_custom_call.1} parent=5 // pred_check_branch
        %149 = sbr.rel (%p147) target = $region24
      $region23: #{tpu_custom_call.1} parent=5 // pred_region
        // Predicated region
        $region25: #{tpu_custom_call.1} parent=23 // pred_check
          %p150 = pneg %p91
        $region26: #{tpu_custom_call.1} parent=23 // pred_check_branch
          %152 = sbr.rel (%p150) target = $region28
        $region27: #{tpu_custom_call.1} parent=23 // pred_region
          %s153 = sand.u32 %s81, 1
          %s154 = scalar_lea.sflag [#allocation3], %s153
          %s155 = sand.u32 %s81, 1
          %s156 = smul.addr %s155, 32
          %s157 = scalar_lea.vmem [#allocation2], %s156
          %s158 = smul.u32 2, %s23
          %s160 = ssub.s32 512, 512
          %161 = vsyncadd %s154, %s160
          %s162 = smul.addr %s22, 4
          %s163 = sadd.s32 %s158, %s162
          %s164 = smul.addr %s163, 128
          %s165 = scalar_lea.hbm %s2, %s164
          %s166 = sshll.u32 %s157, 4
          %s167 = int_to_ptr.vmem [resolvable:$true] %s166
          %172 = dma.hbm_to_vmem [thread:$0]  %s165, 512, %s167, %s154, 256, 256, 16
        $region28: #{tpu_custom_call.1} parent=23 // pred_fallthru
          _
      $region24: #{tpu_custom_call.1} parent=5 // pred_fallthru
        _
      %p173 = scmp.le.s32.totalorder 1, %s15
      %p174 = scmp.lt.s32.totalorder %s15, 7
      %p175 = pnand %p173, %p174
      %p176 = pneg %p175
      // Predicated region
      $region29: #{tpu_custom_call.1} parent=5 // pred_check
        _
      $region30: #{tpu_custom_call.1} parent=5 // pred_check_branch
        %178 = sbr.rel (%p175) target = $region32
      $region31: #{tpu_custom_call.1} parent=5 // pred_region
        %s179 = ssub.s32 %s15, 1
        %s180 = sand.u32 %s84, 1
        %s181 = scalar_lea.sflag [#allocation3], %s180
        %s182 = sand.u32 %s84, 1
        %s183 = smul.addr %s182, 32
        %s184 = scalar_lea.vmem [#allocation2], %s183
        // Predicated region
        $region33: #{tpu_custom_call.1} parent=31 // pred_check
          %p185 = pneg %p97
        $region34: #{tpu_custom_call.1} parent=31 // pred_check_branch
          %187 = sbr.rel (%p185) target = $region36
        $region35: #{tpu_custom_call.1} parent=31 // pred_region
          %188 = dma.done %s181, 512
        $region36: #{tpu_custom_call.1} parent=31 // pred_fallthru
          _
        %p189 = pneg %p48
        %p190 = pneg %p45
        %p191 = pneg %p69
        %p192 = pneg %p66
        %s193 = sand.u32 %s84, 1
        %s194 = scalar_lea.sflag [#allocation3], %s193
        %s195 = sand.u32 %s84, 1
        %s196 = smul.addr %s195, 32
        %s197 = scalar_lea.vmem [#allocation2], %s196
        %p198 = pneg %p97
        %p199 = pneg %p94
        %p200 = pneg %p125
        %p201 = pneg %p122
        %s202 = sand.u32 %s112, 1
        %s203 = scalar_lea.sflag [#allocation4], %s202
        %s204 = sand.u32 %s112, 1
        %s205 = smul.addr %s204, 16
        %s206 = scalar_lea.vmem [#allocation5], %s205
        %s207 = smul.u32 2, %s25
        %s208 = smul.u32 2, %s25
        %v209 = vld [vmem:[%s184] sm:$0xff]
        %v210 = vld [vmem:[%s184 + $0x8] sm:$0xff]
        %v211 = vld [vmem:[%s184 + $0x10] sm:$0xff]
        %v212 = vld [vmem:[%s184 + $0x18] sm:$0xff]
        %v213 = vld [vmem:[%s0] sm:$0xff]
        %v214 = vld [vmem:[%s1] sm:$0xff]
        %216 = vset.pattern.permute.xlu0 0
        %217 = vperm.xlu0 %216, %v214
        %v218 = vpop.permute.xlu0 %217
        %vm220 = vcmask 130048
        %v222 = vsel %vm220, %v213, 0
        %224 = vmatprep.subr.mxu0 %v210
        %225 = vmatpush1.msra.mxu0 %v209
        %226 = vmatprep.subr.mxu0 %v212
        %227 = vmatpush1.msra.mxu0 %v211
        %228 = vmatprep.subr.mxu0 0.0
        %229 = vmatpush1.msra.mxu0 0.0
        %230 = vmatprep.subr.mxu0 0.0
        %231 = vmatpush1.msra.mxu0 0.0
        %232 = vmatprep.subr.mxu0 0.0
        %233 = vmatpush1.msra.mxu0 0.0
        %234 = vmatprep.subr.mxu0 0.0
        %235 = vmatpush1.msra.mxu0 0.0
        %236 = vmatprep.subr.mxu0 0.0
        %237 = vmatpush1.msra.mxu0 0.0
        %238 = vmatprep.subr.mxu0 0.0
        %239 = vmatpush1.msra.mxu0 0.0
        %240 = vmatprep.subr.mxu0 0.0
        %241 = vmatpush1.msra.mxu0 0.0
        %242 = vmatprep.subr.mxu0 0.0
        %243 = vmatpush1.msra.mxu0 0.0
        %244 = vmatprep.subr.mxu0 0.0
        %245 = vmatpush1.msra.mxu0 0.0
        %246 = vmatprep.subr.mxu0 0.0
        %247 = vmatpush1.msra.mxu0 0.0
        %248 = vmatprep.subr.mxu0 0.0
        %249 = vmatpush1.msra.mxu0 0.0
        %250 = vmatprep.subr.mxu0 0.0
        %251 = vmatpush1.msra.mxu0 0.0
        %252 = vmatprep.subr.mxu0 0.0
        %253 = vmatpush1.msra.mxu0 0.0
        %254 = vmatprep.subr.mxu0 0.0
        %255 = vmatpush1.msra.mxu0 0.0
        %256 = vmatprep.subr.mxu0 0.0
        %257 = vmatpush1.msra.mxu0 0.0
        %258 = vmatprep.subr.mxu0 0.0
        %259 = vmatpush1.msra.mxu0 0.0
        %260 = vmatprep.subr.mxu0 0.0
        %261 = vmatpush1.msra.mxu0 0.0
        %262 = vmatprep.subr.mxu0 0.0
        %263 = vmatpush1.msra.mxu0 0.0
        %264 = vmatprep.subr.mxu0 0.0
        %265 = vmatpush1.msra.mxu0 0.0
        %266 = vmatprep.subr.mxu0 0.0
        %267 = vmatpush1.msra.mxu0 0.0
        %268 = vmatprep.subr.mxu0 0.0
        %269 = vmatpush1.msra.mxu0 0.0
        %270 = vmatprep.subr.mxu0 0.0
        %271 = vmatpush1.msra.mxu0 0.0
        %272 = vmatprep.subr.mxu0 0.0
        %273 = vmatpush1.msra.mxu0 0.0
        %274 = vmatprep.subr.mxu0 0.0
        %275 = vmatpush1.msra.mxu0 0.0
        %276 = vmatprep.subr.mxu0 0.0
        %277 = vmatpush1.msra.mxu0 0.0
        %278 = vmatprep.subr.mxu0 0.0
        %279 = vmatpush1.msra.mxu0 0.0
        %280 = vmatprep.subr.mxu0 0.0
        %281 = vmatpush1.msra.mxu0 0.0
        %282 = vmatprep.subr.mxu0 0.0
        %283 = vmatpush1.msra.mxu0 0.0
        %284 = vmatprep.subr.mxu0 0.0
        %285 = vmatpush1.msra.mxu0 0.0
        %286 = vmatprep.subr.mxu0 0.0
        %287 = vmatpush1.msra.mxu0 0.0
        %288 = vmatprep.mubr.f32.mxu0 0.0
        %289 = vmatmul.mubr.f32.gmra.mrb[0].mxu0 %v222
        %v290 = vpop.f32.mrb[0].mxu0
        %v291 = vadd.f32 %v218, %v290
        %v292 = vpop.f32.mrb[0].mxu0
        %v293 = vadd.f32 %v218, %v292
        %294 = vdwg.mxu0
        %v295 = vrot.slane %v291, 4
        %v296 = vmax.f32 %v291, %v295
        %v297 = vrot.slane %v296, 2
        %v298 = vmax.f32 %v296, %v297
        %v299 = vrot.slane %v298, 1
        %v300 = vmax.f32 %v298, %v299
        %v301 = vrot.slane %v293, 4
        %v302 = vmax.f32 %v293, %v301
        %v303 = vrot.slane %v302, 2
        %v304 = vmax.f32 %v302, %v303
        %v305 = vrot.slane %v304, 1
        %v306 = vmax.f32 %v304, %v305
        %v307 = vsub.f32 %v291, %v300
        %v308 = vsub.f32 %v293, %v306
        %v309 = vmul.f32 %v307, 1.442695
        %v310 = vpow.pop %v309
        %v311 = vmul.f32 %v308, 1.442695
        %v312 = vpow.pop %v311
        %v313 = vrot.slane %v310, 4
        %v314 = vadd.f32 %v310, %v313
        %v315 = vrot.slane %v314, 2
        %v316 = vadd.f32 %v314, %v315
        %v317 = vrot.slane %v316, 1
        %v318 = vadd.f32 %v316, %v317
        %v319 = vrot.slane %v312, 4
        %v320 = vadd.f32 %v312, %v319
        %v321 = vrot.slane %v320, 2
        %v322 = vadd.f32 %v320, %v321
        %v323 = vrot.slane %v322, 1
        %v324 = vadd.f32 %v322, %v323
        %v325 = vrcp.pop %v318
        %v326 = vrcp.pop %v324
        %v327 = vmul.f32 %v310, %v325
        %v328 = vmul.f32 %v312, %v326
        %329 = vst [vmem:[%s206] sm:$0xff] %v327
        %330 = vst [vmem:[%s206 + $0x8] sm:$0xff] %v328
        %s331 = sand.u32 %s112, 1
        %s332 = scalar_lea.sflag [#allocation4], %s331
        %s333 = sand.u32 %s112, 1
        %s334 = smul.addr %s333, 16
        %s335 = scalar_lea.vmem [#allocation5], %s334
        // Predicated region
        $region37: #{tpu_custom_call.1} parent=31 // pred_check
          %p336 = pneg %p122
        $region38: #{tpu_custom_call.1} parent=31 // pred_check_branch
          %338 = sbr.rel (%p336) target = $region40
        $region39: #{tpu_custom_call.1} parent=31 // pred_region
          %s339 = smul.u32 2, %s25
          %s341 = ssub.s32 256, 256
          %342 = vsyncadd %s332, %s341
          %s343 = smul.addr %s24, 2
          %s344 = sadd.s32 %s339, %s343
          %s345 = smul.addr %s344, 128
          %s346 = scalar_lea.hbm %s3, %s345
          %s348 = sshll.u32 %s335, 4
          %s349 = int_to_ptr.vmem [resolvable:$true] %s348
          %351 = dma.vmem_to_hbm [thread:$0]  %s349, 256, %s346, %s332
        $region40: #{tpu_custom_call.1} parent=31 // pred_fallthru
          _
      $region32: #{tpu_custom_call.1} parent=5 // pred_fallthru
        _
      %p352 = scmp.le.s32.totalorder 2, %s15
      // Predicated region
      $region41: #{tpu_custom_call.1} parent=5 // pred_check
        %p353 = pneg %p352
      $region42: #{tpu_custom_call.1} parent=5 // pred_check_branch
        %355 = sbr.rel (%p353) target = $region44
      $region43: #{tpu_custom_call.1} parent=5 // pred_region
        %s356 = ssub.s32 %s15, 2
        // Predicated region
        $region45: #{tpu_custom_call.1} parent=43 // pred_check
          %p357 = pneg %p128
        $region46: #{tpu_custom_call.1} parent=43 // pred_check_branch
          %359 = sbr.rel (%p357) target = $region48
        $region47: #{tpu_custom_call.1} parent=43 // pred_region
          %s360 = sand.u32 %s113, 1
          %s361 = scalar_lea.sflag [#allocation4], %s360
          %s362 = sand.u32 %s113, 1
          %s363 = smul.addr %s362, 16
          %s364 = scalar_lea.vmem [#allocation5], %s363
          %365 = dma.done %s361, 256
        $region48: #{tpu_custom_call.1} parent=43 // pred_fallthru
          _
      $region44: #{tpu_custom_call.1} parent=5 // pred_fallthru
        _
    $region6: #{tpu_custom_call.1} parent=1 // loop_footer
      %s19 = sadd.s32 1, %s15
    $region7: #{tpu_custom_call.1} parent=1 // loop_footer_branch
      %14 = sbr.rel target = $region3
    $region8: #{tpu_custom_call.1} parent=1 // loop_exit
      _
    %366 = vsyncpa [#allocation3], 1
    %s367 = scalar_lea.sflag [#allocation3], 1
    %368 = vsyncpa %s367, 1
    %369 = vsyncpa [#allocation4], 1
    %s370 = scalar_lea.sflag [#allocation4], 1
    %371 = vsyncpa %s370, 1

</llo_original>
